<compile_context>
chip_gen: v6e
topology: v6e:2x2x1
jax: 0.10.0
libtpu: 0.0.40
codegen_flags: <defaults>
</compile_context>

<pallas_src>
import functools

import jax
import jax.numpy as jnp
from jax.experimental import pallas as pl
from jax.experimental.pallas import tpu as pltpu

BN_EPS = 1e-5


def _round_up(a, m):
    return ((a + m - 1) // m) * m


def _mlr2_kernel(x_ref, w1_ref, p_ref, b2_ref, o_ref, stats_ref, coef_ref,
                 *, b_true, tb, padded):
    phase = pl.program_id(0)
    i = pl.program_id(1)
    nb = pl.num_programs(1)

    b1 = p_ref[0:1, :]        # (1, 32)
    gamma = p_ref[1:2, :]     # (1, 32)
    beta = p_ref[2:3, :]      # (1, 32)
    w2_row = p_ref[3:4, :]    # (1, 32)

    # fc1 + ReLU.  Recomputed in both phases: with K=16 this is far cheaper
    # than round-tripping the (B, 32) activation through HBM.
    h = jnp.dot(x_ref[...], w1_ref[...],
                preferred_element_type=jnp.float32) + b1
    h = jnp.maximum(h, 0.0)                                   # (tb, 32)

    # ---- phase 0: accumulate batch statistics (sum, sum of squares) -------
    @pl.when(phase == 0)
    def _():
        @pl.when(i == 0)
        def _():
            stats_ref[...] = jnp.zeros_like(stats_ref)

        if padded:
            # Mask padded rows out of the statistics (BN must use true B).
            row = i * tb + jax.lax.broadcasted_iota(jnp.int32, (tb, 1), 0)
            hm = jnp.where(row < b_true, h, 0.0)
        else:
            hm = h

        stats_ref[0:1, :] += jnp.sum(hm, axis=0, keepdims=True)
        stats_ref[1:2, :] += jnp.sum(hm * hm, axis=0, keepdims=True)

        @pl.when(i == nb - 1)
        def _():
            inv_n = 1.0 / b_true
            mean = stats_ref[0:1, :] * inv_n
            var = stats_ref[1:2, :] * inv_n - mean * mean      # biased var
            scale = gamma * jax.lax.rsqrt(var + BN_EPS)
            coef_ref[0:1, :] = scale
            coef_ref[1:2, :] = beta - mean * scale

        # Output block is revisited (and overwritten) in phase 1; write zeros
        # so the intermediate writeback is deterministic.
        o_ref[...] = jnp.zeros_like(o_ref)

    # ---- phase 1: normalize (single FMA) + fc2 (VPU mul + lane reduce) ----
    @pl.when(phase == 1)
    def _():
        h_bn = h * coef_ref[0:1, :] + coef_ref[1:2, :]         # (tb, 32)
        y = jnp.sum(h_bn * w2_row, axis=1) + b2_ref[0, 0]      # (tb,)
        o_ref[0, 0, :] = y.astype(o_ref.dtype)                 # lane-dense row


def mlr2_forward(x, w1, b1, gamma, beta, w2, b2, *, tb=None):
    """x: (B, F);  w1: (F, 32);  w2: (32, 1)  (weights stored as (in, out))."""
    B, F = x.shape
    H = w1.shape[1]

    if tb is None:
        tb = min(512, _round_up(B, 8))      # lane/sublane-friendly batch tile
    assert tb % 8 == 0 and tb > 0
    Bp = _round_up(B, tb)
    nb = Bp // tb
    padded = Bp != B
    if padded:
        x = jnp.pad(x, ((0, Bp - B), (0, 0)))

    # Pack all per-feature params into one (4, H) transfer; scalar b2 -> SMEM.
    params = jnp.stack(
        [b1, gamma, beta, w2.reshape(-1)], axis=0).astype(jnp.float32)
    b2s = b2.reshape(1, 1).astype(jnp.float32)

    kernel = functools.partial(_mlr2_kernel, b_true=B, tb=tb, padded=padded)

    out = pl.pallas_call(
        kernel,
        out_shape=jax.ShapeDtypeStruct((nb, 1, tb), jnp.float32),
        grid_spec=pltpu.PrefetchScalarGridSpec(
            num_scalar_prefetch=0,
            grid=(2, nb),                                   # (phase, batch tile)
            in_specs=[
                pl.BlockSpec((tb, F), lambda p, i: (i, 0)),     # x tile
                pl.BlockSpec((F, H), lambda p, i: (0, 0)),      # w1 (resident)
                pl.BlockSpec((4, H), lambda p, i: (0, 0)),      # packed params
                pl.BlockSpec(memory_space=pltpu.MemorySpace.SMEM),  # b2 scalar
            ],
            out_specs=pl.BlockSpec((1, 1, tb), lambda p, i: (i, 0, 0)),
            scratch_shapes=[
                pltpu.VMEM((2, H), jnp.float32),   # sum / sum-of-squares
                pltpu.VMEM((2, H), jnp.float32),   # BN scale / shift
            ],
        ),
        # TODO(synk): phase 1 is batch-parallel; splitting it into its own
        # pallas_call would allow dimension_semantics=("parallel",) for v7x's
        # two TensorCores at the cost of a second launch.
        compiler_params=pltpu.CompilerParams(
            dimension_semantics=("arbitrary", "arbitrary")),
    )(x, w1, params, b2s)

    return out.reshape(Bp)[:B].reshape(B, 1)


def mlr2_reference(x, w1, b1, gamma, beta, w2, b2):
    h = jnp.maximum(x @ w1 + b1, 0.0)
    mean = jnp.mean(h, axis=0, keepdims=True)
    var = jnp.mean((h - mean) ** 2, axis=0, keepdims=True)
    h = (h - mean) / jnp.sqrt(var + BN_EPS) * gamma + beta
    return h @ w2 + b2


if __name__ == "__main__":
    FEATURE_NUM = 16
    HIDDEN = 32   # fixed by the module (fc1 out / BN features)

    key = jax.random.PRNGKey(0)
    kx, kw1, kb1, kg, kbt, kw2, kb2, kx2 = jax.random.split(key, 8)

    # Deterministic params (shapes from MLR2.__init__), stored as (in, out).
    w1 = jax.random.normal(kw1, (FEATURE_NUM, HIDDEN), jnp.float32) * 0.1
    b1 = jax.random.normal(kb1, (HIDDEN,), jnp.float32) * 0.1
    gamma = 1.0 + 0.1 * jax.random.normal(kg, (HIDDEN,), jnp.float32)
    beta = 0.1 * jax.random.normal(kbt, (HIDDEN,), jnp.float32)
    w2 = jax.random.normal(kw2, (HIDDEN, 1), jnp.float32) * 0.1
    b2 = jax.random.normal(kb2, (1,), jnp.float32) * 0.1

    # Case 1: tiny batch, single tile (B equals the tile).
    x = jax.random.normal(kx, (8, FEATURE_NUM), jnp.float32)
    out = jax.block_until_ready(mlr2_forward(x, w1, b1, gamma, beta, w2, b2))
    ref = mlr2_reference(x, w1, b1, gamma, beta, w2, b2)
    assert out.shape == (8, 1)
    assert jnp.allclose(out, ref, atol=1e-4, rtol=1e-4), "mismatch (case 1)"

    # Case 2: multi-tile batch grid with padding (exercises two-pass BN stats
    # accumulation and the ragged-row mask).
    x2 = jax.random.normal(kx2, (20, FEATURE_NUM), jnp.float32)
    out2 = jax.block_until_ready(
        mlr2_forward(x2, w1, b1, gamma, beta, w2, b2, tb=8))
    ref2 = mlr2_reference(x2, w1, b1, gamma, beta, w2, b2)
    assert out2.shape == (20, 1)
    assert jnp.allclose(out2, ref2, atol=1e-4, rtol=1e-4), "mismatch (case 2)"

    print("KERNEL_OK")
</pallas_src>

<mosaic_0001>
module attributes {stable_mosaic.version = 11 : i64} {
  func.func @_mlr2_kernel(%arg0: i32, %arg1: i32, %arg2: memref<8x16xf32, #tpu.memory_space<vmem>>, %arg3: memref<16x32xf32, #tpu.memory_space<vmem>>, %arg4: memref<4x32xf32, #tpu.memory_space<vmem>>, %arg5: memref<1x1xf32, #tpu.memory_space<smem>>, %arg6: memref<1x1x8xf32, #tpu.memory_space<vmem>>, %arg7: memref<2x32xf32, #tpu.memory_space<vmem>>, %arg8: memref<2x32xf32, #tpu.memory_space<vmem>>) attributes {dimension_semantics = [#tpu.dimension_semantics<arbitrary>, #tpu.dimension_semantics<arbitrary>], iteration_bounds = array<i64: 2, 1>, scalar_prefetch = 0 : i64, scratch_operands = 2 : i64, tpu.core_type = #tpu.core_type<tc>, window_params = [{transform_indices = @transform_0, window_bounds = array<i64: 8, 16>}, {pipeline_mode = #tpu.pipeline_mode<synchronous>, transform_indices = @transform_1, window_bounds = array<i64: 16, 32>}, {pipeline_mode = #tpu.pipeline_mode<synchronous>, transform_indices = @transform_2, window_bounds = array<i64: 4, 32>}, {transform_indices = @transform_3, window_bounds = array<i64: 1, 1>}, {transform_indices = @transform_4, window_bounds = array<i64: 1, 1, 8>}]} {
    %c0 = arith.constant 0 : index
    %c0_0 = arith.constant 0 : index
    %0 = vector.load %arg4[%c0, %c0_0] : memref<4x32xf32, #tpu.memory_space<vmem>>, vector<1x32xf32>
    %c1 = arith.constant 1 : index
    %c0_1 = arith.constant 0 : index
    %1 = vector.load %arg4[%c1, %c0_1] : memref<4x32xf32, #tpu.memory_space<vmem>>, vector<1x32xf32>
    %c2 = arith.constant 2 : index
    %c0_2 = arith.constant 0 : index
    %2 = vector.load %arg4[%c2, %c0_2] : memref<4x32xf32, #tpu.memory_space<vmem>>, vector<1x32xf32>
    %c3 = arith.constant 3 : index
    %c0_3 = arith.constant 0 : index
    %3 = vector.load %arg4[%c3, %c0_3] : memref<4x32xf32, #tpu.memory_space<vmem>>, vector<1x32xf32>
    %c0_4 = arith.constant 0 : index
    %c0_5 = arith.constant 0 : index
    %4 = vector.load %arg2[%c0_4, %c0_5] : memref<8x16xf32, #tpu.memory_space<vmem>>, vector<8x16xf32>
    %c0_6 = arith.constant 0 : index
    %c0_7 = arith.constant 0 : index
    %5 = vector.load %arg3[%c0_6, %c0_7] : memref<16x32xf32, #tpu.memory_space<vmem>>, vector<16x32xf32>
    %cst = arith.constant dense<0.000000e+00> : vector<8x32xf32>
    %6 = tpu.matmul %4, %5, %cst {dimension_numbers = #tpu.dot_dimension_numbers<[1], [0], [0], [1], [0, 0, 1, 1], [], []>} : vector<8x16xf32>, vector<16x32xf32>, vector<8x32xf32> -> vector<8x32xf32>
    %7 = vector.broadcast %0 : vector<1x32xf32> to vector<8x32xf32>
    %8 = arith.addf %6, %7 : vector<8x32xf32>
    %cst_8 = arith.constant 0.000000e+00 : f32
    %9 = vector.broadcast %cst_8 : f32 to vector<8x32xf32>
    %10 = arith.maximumf %8, %9 : vector<8x32xf32>
    %c0_i32 = arith.constant 0 : i32
    %11 = arith.cmpi eq, %arg0, %c0_i32 : i32
    %12 = arith.extui %11 : i1 to i32
    %c0_i32_9 = arith.constant 0 : i32
    %13 = arith.cmpi ne, %12, %c0_i32_9 : i32
    scf.if %13 {
      %c0_i32_11 = arith.constant 0 : i32
      %17 = arith.cmpi eq, %arg1, %c0_i32_11 : i32
      %18 = arith.extui %17 : i1 to i32
      %c0_i32_12 = arith.constant 0 : i32
      %19 = arith.cmpi ne, %18, %c0_i32_12 : i32
      scf.if %19 {
        %cst_29 = arith.constant 0.000000e+00 : f32
        %36 = vector.broadcast %cst_29 : f32 to vector<2x32xf32>
        %c0_30 = arith.constant 0 : index
        %c0_31 = arith.constant 0 : index
        %37 = vector.load %arg7[%c0_30, %c0_31] : memref<2x32xf32, #tpu.memory_space<vmem>>, vector<2x32xf32>
        tpu.vector_store %arg7[%c0_30, %c0_31], %36 {strides = array<i32>} : memref<2x32xf32, #tpu.memory_space<vmem>>, vector<2x32xf32>,
      } else {
      }
      %c0_13 = arith.constant 0 : index
      %c0_14 = arith.constant 0 : index
      %20 = vector.load %arg7[%c0_13, %c0_14] : memref<2x32xf32, #tpu.memory_space<vmem>>, vector<1x32xf32>
      %cst_15 = arith.constant dense<0.000000e+00> : vector<32xf32>
      %21 = vector.multi_reduction <add>, %10, %cst_15 [0] : vector<8x32xf32> to vector<32xf32>
      %22 = vector.shape_cast %21 : vector<32xf32> to vector<1x32xf32>
      %23 = arith.addf %20, %22 : vector<1x32xf32>
      %c0_16 = arith.constant 0 : index
      %c0_17 = arith.constant 0 : index
      %24 = vector.load %arg7[%c0_16, %c0_17] : memref<2x32xf32, #tpu.memory_space<vmem>>, vector<1x32xf32>
      tpu.vector_store %arg7[%c0_16, %c0_17], %23 {strides = array<i32>} : memref<2x32xf32, #tpu.memory_space<vmem>>, vector<1x32xf32>,
      %c1_18 = arith.constant 1 : index
      %c0_19 = arith.constant 0 : index
      %25 = vector.load %arg7[%c1_18, %c0_19] : memref<2x32xf32, #tpu.memory_space<vmem>>, vector<1x32xf32>
      %26 = arith.mulf %10, %10 : vector<8x32xf32>
      %cst_20 = arith.constant dense<0.000000e+00> : vector<32xf32>
      %27 = vector.multi_reduction <add>, %26, %cst_20 [0] : vector<8x32xf32> to vector<32xf32>
      %28 = vector.shape_cast %27 : vector<32xf32> to vector<1x32xf32>
      %29 = arith.addf %25, %28 : vector<1x32xf32>
      %c1_21 = arith.constant 1 : index
      %c0_22 = arith.constant 0 : index
      %30 = vector.load %arg7[%c1_21, %c0_22] : memref<2x32xf32, #tpu.memory_space<vmem>>, vector<1x32xf32>
      tpu.vector_store %arg7[%c1_21, %c0_22], %29 {strides = array<i32>} : memref<2x32xf32, #tpu.memory_space<vmem>>, vector<1x32xf32>,
      %c0_i32_23 = arith.constant 0 : i32
      %31 = arith.cmpi eq, %arg1, %c0_i32_23 : i32
      %32 = arith.extui %31 : i1 to i32
      %c0_i32_24 = arith.constant 0 : i32
      %33 = arith.cmpi ne, %32, %c0_i32_24 : i32
      scf.if %33 {
        %c0_29 = arith.constant 0 : index
        %c0_30 = arith.constant 0 : index
        %36 = vector.load %arg7[%c0_29, %c0_30] : memref<2x32xf32, #tpu.memory_space<vmem>>, vector<1x32xf32>
        %cst_31 = arith.constant 1.250000e-01 : f32
        %37 = vector.broadcast %cst_31 : f32 to vector<1x32xf32>
        %38 = arith.mulf %36, %37 : vector<1x32xf32>
        %c1_32 = arith.constant 1 : index
        %c0_33 = arith.constant 0 : index
        %39 = vector.load %arg7[%c1_32, %c0_33] : memref<2x32xf32, #tpu.memory_space<vmem>>, vector<1x32xf32>
        %cst_34 = arith.constant 1.250000e-01 : f32
        %40 = vector.broadcast %cst_34 : f32 to vector<1x32xf32>
        %41 = arith.mulf %39, %40 : vector<1x32xf32>
        %42 = arith.mulf %38, %38 : vector<1x32xf32>
        %43 = arith.subf %41, %42 : vector<1x32xf32>
        %cst_35 = arith.constant 9.99999974E-6 : f32
        %44 = vector.broadcast %cst_35 : f32 to vector<1x32xf32>
        %45 = arith.addf %43, %44 : vector<1x32xf32>
        %46 = math.rsqrt %45 : vector<1x32xf32>
        %47 = arith.mulf %1, %46 : vector<1x32xf32>
        %c0_36 = arith.constant 0 : index
        %c0_37 = arith.constant 0 : index
        %48 = vector.load %arg8[%c0_36, %c0_37] : memref<2x32xf32, #tpu.memory_space<vmem>>, vector<1x32xf32>
        tpu.vector_store %arg8[%c0_36, %c0_37], %47 {strides = array<i32>} : memref<2x32xf32, #tpu.memory_space<vmem>>, vector<1x32xf32>,
        %49 = arith.mulf %38, %47 : vector<1x32xf32>
        %50 = arith.subf %2, %49 : vector<1x32xf32>
        %c1_38 = arith.constant 1 : index
        %c0_39 = arith.constant 0 : index
        %51 = vector.load %arg8[%c1_38, %c0_39] : memref<2x32xf32, #tpu.memory_space<vmem>>, vector<1x32xf32>
        tpu.vector_store %arg8[%c1_38, %c0_39], %50 {strides = array<i32>} : memref<2x32xf32, #tpu.memory_space<vmem>>, vector<1x32xf32>,
      } else {
      }
      %cst_25 = arith.constant 0.000000e+00 : f32
      %34 = vector.broadcast %cst_25 : f32 to vector<1x1x8xf32>
      %c0_26 = arith.constant 0 : index
      %c0_27 = arith.constant 0 : index
      %c0_28 = arith.constant 0 : index
      %35 = vector.load %arg6[%c0_26, %c0_27, %c0_28] : memref<1x1x8xf32, #tpu.memory_space<vmem>>, vector<1x1x8xf32>
      tpu.vector_store %arg6[%c0_26, %c0_27, %c0_28], %34 {strides = array<i32>} : memref<1x1x8xf32, #tpu.memory_space<vmem>>, vector<1x1x8xf32>,
    } else {
    }
    %c1_i32 = arith.constant 1 : i32
    %14 = arith.cmpi eq, %arg0, %c1_i32 : i32
    %15 = arith.extui %14 : i1 to i32
    %c0_i32_10 = arith.constant 0 : i32
    %16 = arith.cmpi ne, %15, %c0_i32_10 : i32
    scf.if %16 {
      %c0_11 = arith.constant 0 : index
      %c0_12 = arith.constant 0 : index
      %17 = vector.load %arg8[%c0_11, %c0_12] : memref<2x32xf32, #tpu.memory_space<vmem>>, vector<1x32xf32>
      %18 = vector.broadcast %17 : vector<1x32xf32> to vector<8x32xf32>
      %19 = arith.mulf %10, %18 : vector<8x32xf32>
      %c1_13 = arith.constant 1 : index
      %c0_14 = arith.constant 0 : index
      %20 = vector.load %arg8[%c1_13, %c0_14] : memref<2x32xf32, #tpu.memory_space<vmem>>, vector<1x32xf32>
      %21 = vector.broadcast %20 : vector<1x32xf32> to vector<8x32xf32>
      %22 = arith.addf %19, %21 : vector<8x32xf32>
      %23 = vector.broadcast %3 : vector<1x32xf32> to vector<8x32xf32>
      %24 = arith.mulf %22, %23 : vector<8x32xf32>
      %cst_15 = arith.constant dense<0.000000e+00> : vector<8xf32>
      %25 = vector.multi_reduction <add>, %24, %cst_15 [1] : vector<8x32xf32> to vector<8xf32>
      %c0_16 = arith.constant 0 : index
      %c0_17 = arith.constant 0 : index
      %26 = memref.load %arg5[%c0_16, %c0_17] : memref<1x1xf32, #tpu.memory_space<smem>>
      %27 = vector.broadcast %26 : f32 to vector<8xf32>
      %28 = arith.addf %25, %27 : vector<8xf32>
      %c0_18 = arith.constant 0 : index
      %c0_19 = arith.constant 0 : index
      %c0_20 = arith.constant 0 : index
      %29 = vector.load %arg6[%c0_18, %c0_19, %c0_20] : memref<1x1x8xf32, #tpu.memory_space<vmem>>, vector<1x1x8xf32>
      %30 = vector.shape_cast %29 : vector<1x1x8xf32> to vector<8xf32>
      %31 = vector.shape_cast %28 : vector<8xf32> to vector<1x1x8xf32>
      tpu.vector_store %arg6[%c0_18, %c0_19, %c0_20], %31 {strides = array<i32>} : memref<1x1x8xf32, #tpu.memory_space<vmem>>, vector<1x1x8xf32>,
    } else {
    }
    return
  }
  func.func @transform_0(%arg0: i32, %arg1: i32) -> (i32, i32) {
    %c0_i32 = arith.constant 0 : i32
    %c0_i32_0 = arith.constant 0 : i32
    return %arg1, %c0_i32 : i32, i32
  }
  func.func @transform_1(%arg0: i32, %arg1: i32) -> (i32, i32) {
    %c0_i32 = arith.constant 0 : i32
    %c0_i32_0 = arith.constant 0 : i32
    %c0_i32_1 = arith.constant 0 : i32
    return %c0_i32, %c0_i32_0 : i32, i32
  }
  func.func @transform_2(%arg0: i32, %arg1: i32) -> (i32, i32) {
    %c0_i32 = arith.constant 0 : i32
    %c0_i32_0 = arith.constant 0 : i32
    %c0_i32_1 = arith.constant 0 : i32
    return %c0_i32, %c0_i32_0 : i32, i32
  }
  func.func @transform_3(%arg0: i32, %arg1: i32) -> (i32, i32) {
    %c0_i32 = arith.constant 0 : i32
    %c0_i32_0 = arith.constant 0 : i32
    %c0_i32_1 = arith.constant 0 : i32
    return %c0_i32, %c0_i32_0 : i32, i32
  }
  func.func @transform_4(%arg0: i32, %arg1: i32) -> (i32, i32, i32) {
    %c0_i32 = arith.constant 0 : i32
    %c0_i32_0 = arith.constant 0 : i32
    %c0_i32_1 = arith.constant 0 : i32
    return %arg1, %c0_i32, %c0_i32_0 : i32, i32, i32
  }
}

</mosaic_0001>

<llo_original>
// kernel: tpu_custom_call.1
$region0: #{tpu_custom_call.1}
  #allocation0 [shape = 'u32[]', space=smem, size = 0x4, offset = 0x4, fixed_abs, tag = 'smem constant byte address 0x4 - core index']
  #allocation1 [shape = 'u32[144,128]{1,0:T(1,128)}', space=vmem, size = 0x12000, scoped, tag = 'internal scratch']
  #allocation2 [shape = 'f32[2,32]{1,0:T(2,128)}', space=vmem, size = 0x400, scoped, tag = 'scratch operand']
  #allocation3 [shape = 'f32[2,32]{1,0:T(2,128)}', space=vmem, size = 0x400, scoped, tag = 'scratch operand']
  #allocation4 [shape = 'f32[1,1]{1,0:T(1,128)S(6)}', space=smem, size = 0x200, scoped, tag = 'scoped memory for tpu_custom_call.1']
  %s0 = inlined_call_operand.hbm [shape: f32[8,16], index: 0, kind: input, shape index: {}]
  %s1 = inlined_call_operand.hbm [shape: f32[16,32], index: 1, kind: input, shape index: {}]
  %s2 = inlined_call_operand.vmem [shape: f32[4,32], index: 2, kind: input, shape index: {}]
  %s3 = inlined_call_operand.<no memory space> [shape: f32[1,1], index: 3, kind: input, shape index: {}]
  %s4 = inlined_call_operand.hbm [shape: f32[1,1,8], index: 4, kind: output, shape index: {}]
  %s5 = sld [smem:[#allocation0]]
  $region73: #{tpu_custom_call.1} parent=0
    _
  %s7 = ssub.s32 1, %s5
  %s8 = scalar_select 0, %s7, %s5
  %9 = sst [smem:[#allocation4]] %s3
  $region1: #{tpu_custom_call.1} parent=0
    #allocation5 [shape = 'u8[4096]{0}', space=vmem, size = 0x1000, scoped, tag = 'input window, operand 0, single buffered']
    #allocation6 [shape = 's32[2]{0}', space=sflag, size = 0x8, scoped, tag = 'scoped memory for tpu_custom_call.1']
    #allocation7 [shape = 's32[2]{0}', space=sflag, size = 0x8, scoped, tag = 'scoped memory for tpu_custom_call.1']
    #allocation8 [shape = 'u8[8192]{0}', space=vmem, size = 0x2000, scoped, tag = 'input window, operand 1, single buffered']
    #allocation9 [shape = 's32[1]{0}', space=sflag, size = 0x4, scoped, tag = 'scoped memory for tpu_custom_call.1']
    #allocation10 [shape = 'u8[512]{0}', space=vmem, size = 0x400, scoped, tag = 'output window, operand 0, single buffered']
    %10 = vsyncpa [#allocation6], 0
    %11 = vsyncpa [#allocation9], 0
    %12 = vsyncpa [#allocation7], 0
    loop: start=0, step=1, limit=4
    $region2: #{tpu_custom_call.1} parent=1 // loop_pre_header
      _
    $region3: #{tpu_custom_call.1} parent=1 // loop_header
      %s14 = sphi 0, %s18
      %p15 = scmp.ge.s32.totalorder %s14, 4
      %s21 = sphi 0, %s33
      %s22 = sphi 0, %s29
      %s23 = sphi 0, %s21
      %s24 = sphi 0, %s22
      %s25 = sphi 0, %s23
      %s26 = sphi 0, %s24
      %s36 = sphi 0, %s38
      %s39 = sphi 0, %s36
      %s40 = sphi 0, %s39
      %s56 = sphi 0, %s40
      %s60 = sphi 0, %s60
      %s62 = sphi 0, %s60
      %s63 = sphi 0, %s62
      %s77 = sphi 0, %s63
      %s81 = sphi 0, %s81
      %s83 = sphi 0, %s81
      %s84 = sphi 0, %s83
      %s98 = sphi 0, %s84
      %s102 = sphi 0, %s102
      %s104 = sphi 0, %s102
      %s105 = sphi 0, %s104
      %s119 = sphi 0, %s105
      %s125 = sphi 0, %s127
      %s128 = sphi 0, %s125
      %s129 = sphi 0, %s128
      %s145 = sphi 0, %s129
    $region4: #{tpu_custom_call.1} parent=1 // loop_header_branch
      %17 = sbr.rel (%p15) target = $region8
    $region5: #{tpu_custom_call.1} parent=1 // loop_body
      %s19 = ssub.s32 %s14, 1
      %s20 = ssub.s32 %s14, 2
      %s27 = sadd.s32 1, %s22
      %p28 = scmp.ge.s32.totalorder %s27, 1
      %s29 = scalar_select %p28, 0, %s27
      %s30 = sadd.s32 1, %s21
      %s31 = scalar_select %p28, %s30, %s21
      %p32 = scmp.ge.s32.totalorder %s31, 2
      %s33 = scalar_select %p32, 0, %s31
      %s34 = ssub.s32 %s22, %s29
      %p35 = scmp.eq.s32.totalorder %s34, 0
      %s37 = sadd.s32 %s36, 1
      %s38 = scalar_select %p35, %s36, %s37
      %p41 = pneg %p35
      %p42 = scmp.eq.s32.totalorder %s14, 1
      %p43 = por %p41, %p42
      %p44 = scmp.ne.s32.totalorder %s36, %s39
      %p45 = scmp.eq.s32.totalorder %s14, 0
      %p46 = por %p44, %p45
      %p47 = scmp.ne.s32.totalorder %s36, %s39
      %p48 = scmp.eq.s32.totalorder %s19, 1
      %p49 = por %p47, %p48
      %p50 = scmp.ne.s32.totalorder %s39, %s40
      %p51 = scmp.eq.s32.totalorder %s19, 0
      %p52 = por %p50, %p51
      %p53 = scmp.ne.s32.totalorder %s39, %s40
      %p54 = scmp.eq.s32.totalorder %s20, 1
      %p55 = por %p53, %p54
      %p57 = scmp.ne.s32.totalorder %s40, %s56
      %p58 = scmp.eq.s32.totalorder %s20, 0
      %p59 = por %p57, %p58
      %s61 = sadd.s32 %s60, 1
      %p64 = scmp.eq.s32.totalorder %s14, 1
      %p65 = scmp.ne.s32.totalorder %s60, %s62
      %p66 = scmp.eq.s32.totalorder %s14, 0
      %p67 = por %p65, %p66
      %p68 = scmp.ne.s32.totalorder %s60, %s62
      %p69 = scmp.eq.s32.totalorder %s19, 1
      %p70 = por %p68, %p69
      %p71 = scmp.ne.s32.totalorder %s62, %s63
      %p72 = scmp.eq.s32.totalorder %s19, 0
      %p73 = por %p71, %p72
      %p74 = scmp.ne.s32.totalorder %s62, %s63
      %p75 = scmp.eq.s32.totalorder %s20, 1
      %p76 = por %p74, %p75
      %p78 = scmp.ne.s32.totalorder %s63, %s77
      %p79 = scmp.eq.s32.totalorder %s20, 0
      %p80 = por %p78, %p79
      %s82 = sadd.s32 %s81, 1
      %p85 = scmp.eq.s32.totalorder %s14, 1
      %p86 = scmp.ne.s32.totalorder %s81, %s83
      %p87 = scmp.eq.s32.totalorder %s14, 0
      %p88 = por %p86, %p87
      %p89 = scmp.ne.s32.totalorder %s81, %s83
      %p90 = scmp.eq.s32.totalorder %s19, 1
      %p91 = por %p89, %p90
      %p92 = scmp.ne.s32.totalorder %s83, %s84
      %p93 = scmp.eq.s32.totalorder %s19, 0
      %p94 = por %p92, %p93
      %p95 = scmp.ne.s32.totalorder %s83, %s84
      %p96 = scmp.eq.s32.totalorder %s20, 1
      %p97 = por %p95, %p96
      %p99 = scmp.ne.s32.totalorder %s84, %s98
      %p100 = scmp.eq.s32.totalorder %s20, 0
      %p101 = por %p99, %p100
      %s103 = sadd.s32 %s102, 1
      %p106 = scmp.eq.s32.totalorder %s14, 1
      %p107 = scmp.ne.s32.totalorder %s102, %s104
      %p108 = scmp.eq.s32.totalorder %s14, 0
      %p109 = por %p107, %p108
      %p110 = scmp.ne.s32.totalorder %s102, %s104
      %p111 = scmp.eq.s32.totalorder %s19, 1
      %p112 = por %p110, %p111
      %p113 = scmp.ne.s32.totalorder %s104, %s105
      %p114 = scmp.eq.s32.totalorder %s19, 0
      %p115 = por %p113, %p114
      %p116 = scmp.ne.s32.totalorder %s104, %s105
      %p117 = scmp.eq.s32.totalorder %s20, 1
      %p118 = por %p116, %p117
      %p120 = scmp.ne.s32.totalorder %s105, %s119
      %p121 = scmp.eq.s32.totalorder %s20, 0
      %p122 = por %p120, %p121
      %s123 = ssub.s32 %s22, %s29
      %p124 = scmp.eq.s32.totalorder %s123, 0
      %s126 = sadd.s32 %s125, 1
      %s127 = scalar_select %p124, %s125, %s126
      %p130 = pneg %p124
      %p131 = scmp.eq.s32.totalorder %s14, 1
      %p132 = por %p130, %p131
      %p133 = scmp.ne.s32.totalorder %s125, %s128
      %p134 = scmp.eq.s32.totalorder %s14, 0
      %p135 = por %p133, %p134
      %p136 = scmp.ne.s32.totalorder %s125, %s128
      %p137 = scmp.eq.s32.totalorder %s19, 1
      %p138 = por %p136, %p137
      %p139 = scmp.ne.s32.totalorder %s128, %s129
      %p140 = scmp.eq.s32.totalorder %s19, 0
      %p141 = por %p139, %p140
      %p142 = scmp.ne.s32.totalorder %s128, %s129
      %p143 = scmp.eq.s32.totalorder %s20, 1
      %p144 = por %p142, %p143
      %p146 = scmp.ne.s32.totalorder %s129, %s145
      %p147 = scmp.eq.s32.totalorder %s20, 0
      %p148 = por %p146, %p147
      %p149 = scmp.le.s32.totalorder 1, %s14
      %p150 = scmp.lt.s32.totalorder %s14, 3
      %p151 = pnand %p149, %p150
      %p152 = pneg %p151
      // Predicated region
      $region9: #{tpu_custom_call.1} parent=5 // pred_check
        _
      $region10: #{tpu_custom_call.1} parent=5 // pred_check_branch
        %154 = sbr.rel (%p151) target = $region12
      $region11: #{tpu_custom_call.1} parent=5 // pred_region
        %s155 = ssub.s32 %s14, 1
        // Predicated region
        $region13: #{tpu_custom_call.1} parent=11 // pred_check
          %p156 = pneg %p52
        $region14: #{tpu_custom_call.1} parent=11 // pred_check_branch
          %158 = sbr.rel (%p156) target = $region16
        $region15: #{tpu_custom_call.1} parent=11 // pred_region
          %s160 = ssub.s32 128, 128
          %161 = vsyncadd [#allocation6], %s160
          %s162 = smul.addr %s24, 128
          %s163 = scalar_lea.hbm %s0, %s162
          %s165 = sshll.u32 [#allocation5], 4
          %s166 = int_to_ptr.vmem [resolvable:$true] %s165
          %168 = dma.hbm_to_vmem [thread:$0]  %s163, 128, %s166, [#allocation6]
        $region16: #{tpu_custom_call.1} parent=11 // pred_fallthru
          _
        // Predicated region
        $region17: #{tpu_custom_call.1} parent=11 // pred_check
          %p169 = pneg %p73
        $region18: #{tpu_custom_call.1} parent=11 // pred_check_branch
          %171 = sbr.rel (%p169) target = $region20
        $region19: #{tpu_custom_call.1} parent=11 // pred_region
          %s173 = ssub.s32 256, 256
          %174 = vsyncadd [#allocation9], %s173
          %s175 = sshll.u32 [#allocation8], 4
          %s176 = int_to_ptr.vmem [resolvable:$true] %s175
          %181 = dma.hbm_to_vmem [thread:$0]  %s1, 256, %s176, [#allocation9], 128, 128, 8
        $region20: #{tpu_custom_call.1} parent=11 // pred_fallthru
          _
        // Predicated region
        $region21: #{tpu_custom_call.1} parent=11 // pred_check
          %p182 = pneg %p94
        $region22: #{tpu_custom_call.1} parent=11 // pred_check_branch
          %184 = sbr.rel (%p182) target = $region24
        $region23: #{tpu_custom_call.1} parent=11 // pred_region
          _
        $region24: #{tpu_custom_call.1} parent=11 // pred_fallthru
          _
        // Predicated region
        $region25: #{tpu_custom_call.1} parent=11 // pred_check
          %p185 = pneg %p115
        $region26: #{tpu_custom_call.1} parent=11 // pred_check_branch
          %187 = sbr.rel (%p185) target = $region28
        $region27: #{tpu_custom_call.1} parent=11 // pred_region
          _
        $region28: #{tpu_custom_call.1} parent=11 // pred_fallthru
          _
      $region12: #{tpu_custom_call.1} parent=5 // pred_fallthru
        _
      %p188 = scmp.lt.s32.totalorder %s14, 2
      // Predicated region
      $region29: #{tpu_custom_call.1} parent=5 // pred_check
        %p189 = pneg %p188
      $region30: #{tpu_custom_call.1} parent=5 // pred_check_branch
        %191 = sbr.rel (%p189) target = $region32
      $region31: #{tpu_custom_call.1} parent=5 // pred_region
        _
      $region32: #{tpu_custom_call.1} parent=5 // pred_fallthru
        _
      %p192 = scmp.le.s32.totalorder 1, %s14
      %p193 = scmp.lt.s32.totalorder %s14, 3
      %p194 = pnand %p192, %p193
      %p195 = pneg %p194
      // Predicated region
      $region33: #{tpu_custom_call.1} parent=5 // pred_check
        _
      $region34: #{tpu_custom_call.1} parent=5 // pred_check_branch
        %197 = sbr.rel (%p194) target = $region36
      $region35: #{tpu_custom_call.1} parent=5 // pred_region
        %s198 = ssub.s32 %s14, 1
        // Predicated region
        $region37: #{tpu_custom_call.1} parent=35 // pred_check
          %p199 = pneg %p52
        $region38: #{tpu_custom_call.1} parent=35 // pred_check_branch
          %201 = sbr.rel (%p199) target = $region40
        $region39: #{tpu_custom_call.1} parent=35 // pred_region
          %202 = dma.done [#allocation6], 128
        $region40: #{tpu_custom_call.1} parent=35 // pred_fallthru
          _
        // Predicated region
        $region41: #{tpu_custom_call.1} parent=35 // pred_check
          %p203 = pneg %p73
        $region42: #{tpu_custom_call.1} parent=35 // pred_check_branch
          %205 = sbr.rel (%p203) target = $region44
        $region43: #{tpu_custom_call.1} parent=35 // pred_region
          %206 = dma.done [#allocation9], 256
        $region44: #{tpu_custom_call.1} parent=35 // pred_fallthru
          _
        %p207 = pneg %p52
        %p208 = pneg %p49
        %p209 = pneg %p73
        %p210 = pneg %p70
        %p211 = pneg %p94
        %p212 = pneg %p91
        %p213 = pneg %p115
        %p214 = pneg %p112
        %p215 = pneg %p141
        %p216 = pneg %p138
        %v217 = vld [vmem:[%s2] sm:$0x1]
        %v218 = vld [vmem:[%s2 + $0x1] sm:$0x1]
        %v219 = vld [vmem:[%s2 + $0x2] sm:$0x1]
        %v220 = vld [vmem:[%s2 + $0x3] sm:$0x1]
        %v221 = vld [vmem:[#allocation5] sm:$0xff]
        %v222 = vld [vmem:[#allocation8] sm:$0xff]
        %v223 = vld [vmem:[#allocation8 + $0x8] sm:$0xff]
        %v224 = vlaneseq
        %v225 = vshrl.u32 %v224, 7
        %v226 = vsub.s32 0, %v225
        %v227 = vrot.slane %v217, %v226
        %vm228 = vcmask 130048
        %v230 = vsel %vm228, %v221, 0
        %232 = vmatprep.subr.mxu0 0.0
        %233 = vmatpush1.msra.mxu0 0.0
        %234 = vmatprep.subr.mxu0 0.0
        %235 = vmatpush1.msra.mxu0 0.0
        %236 = vmatprep.subr.mxu0 0.0
        %237 = vmatpush1.msra.mxu0 0.0
        %238 = vmatprep.subr.mxu0 0.0
        %239 = vmatpush1.msra.mxu0 0.0
        %240 = vmatprep.subr.mxu0 0.0
        %241 = vmatpush1.msra.mxu0 0.0
        %242 = vmatprep.subr.mxu0 0.0
        %243 = vmatpush1.msra.mxu0 0.0
        %244 = vmatprep.subr.mxu0 0.0
        %245 = vmatpush1.msra.mxu0 0.0
        %246 = vmatprep.subr.mxu0 0.0
        %247 = vmatpush1.msra.mxu0 0.0
        %248 = vmatprep.subr.mxu0 0.0
        %249 = vmatpush1.msra.mxu0 0.0
        %250 = vmatprep.subr.mxu0 0.0
        %251 = vmatpush1.msra.mxu0 0.0
        %252 = vmatprep.subr.mxu0 0.0
        %253 = vmatpush1.msra.mxu0 0.0
        %254 = vmatprep.subr.mxu0 0.0
        %255 = vmatpush1.msra.mxu0 0.0
        %256 = vmatprep.subr.mxu0 0.0
        %257 = vmatpush1.msra.mxu0 0.0
        %258 = vmatprep.subr.mxu0 0.0
        %259 = vmatpush1.msra.mxu0 0.0
        %260 = vmatprep.subr.mxu0 0.0
        %261 = vmatpush1.msra.mxu0 %v223
        %262 = vmatprep.subr.mxu0 0.0
        %263 = vmatpush1.msra.mxu0 %v222
        %264 = vmatprep.subr.mxu0 0.0
        %265 = vmatpush2.msra.mxu0 0.0
        %266 = vmatprep.subr.mxu0 0.0
        %267 = vmatpush2.msra.mxu0 0.0
        %268 = vmatprep.subr.mxu0 0.0
        %269 = vmatpush2.msra.mxu0 0.0
        %270 = vmatprep.subr.mxu0 0.0
        %271 = vmatpush2.msra.mxu0 0.0
        %272 = vmatprep.subr.mxu0 0.0
        %273 = vmatpush2.msra.mxu0 0.0
        %274 = vmatprep.subr.mxu0 0.0
        %275 = vmatpush2.msra.mxu0 0.0
        %276 = vmatprep.subr.mxu0 0.0
        %277 = vmatpush2.msra.mxu0 0.0
        %278 = vmatprep.subr.mxu0 0.0
        %279 = vmatpush2.msra.mxu0 0.0
        %280 = vmatprep.subr.mxu0 0.0
        %281 = vmatpush2.msra.mxu0 0.0
        %282 = vmatprep.subr.mxu0 0.0
        %283 = vmatpush2.msra.mxu0 0.0
        %284 = vmatprep.subr.mxu0 0.0
        %285 = vmatpush2.msra.mxu0 0.0
        %286 = vmatprep.subr.mxu0 0.0
        %287 = vmatpush2.msra.mxu0 0.0
        %288 = vmatprep.subr.mxu0 0.0
        %289 = vmatpush2.msra.mxu0 0.0
        %290 = vmatprep.subr.mxu0 0.0
        %291 = vmatpush2.msra.mxu0 0.0
        %292 = vmatprep.subr.mxu0 0.0
        %293 = vmatpush2.msra.mxu0 0.0
        %294 = vmatprep.subr.mxu0 0.0
        %295 = vmatpush2.msra.mxu0 0.0
        %296 = vmatprep.mubr.f32.mxu0 0.0
        %297 = vmatmul.mubr.f32.gmra.mxu0 %v230
        %v298 = vpop.f32.mrf.mxu0
        %v299 = vadd.f32 %v227, %v298
        %v300 = vpop.f32.mrf.mxu0
        %301 = vdwg.mxu0
        %v302 = vmax.f32 %v299, 0.0
        %p303 = scmp.eq.s32.totalorder %s23, 0
        // Predicated region
        $region45: #{tpu_custom_call.1} parent=35 // pred_check
          %p304 = pneg %p303
        $region46: #{tpu_custom_call.1} parent=35 // pred_check_branch
          %306 = sbr.rel (%p304) target = $region48
        $region47: #{tpu_custom_call.1} parent=35 // pred_region
          %p307 = scmp.eq.s32.totalorder %s24, 0
          // Predicated region
          $region49: #{tpu_custom_call.1} parent=47 // pred_check
            %p308 = pneg %p307
          $region50: #{tpu_custom_call.1} parent=47 // pred_check_branch
            %310 = sbr.rel (%p308) target = $region52
          $region51: #{tpu_custom_call.1} parent=47 // pred_region
            %vm311 = vcmask 254976
            %312 = vst.msk [vmem:[#allocation2] sm:$0x3] %vm311, 0.0
          $region52: #{tpu_custom_call.1} parent=47 // pred_fallthru
            _
          %v313 = vld [vmem:[#allocation2] sm:$0x1]
          %vm314 = vcmask 261120
          %v315 = vsel %vm314, %v302, 0.0
          %v316 = vrot.slane %v315, 4
          %v317 = vadd.f32 %v315, %v316
          %v318 = vrot.slane %v317, 2
          %v319 = vadd.f32 %v317, %v318
          %v320 = vrot.slane %v319, 1
          %v321 = vadd.f32 %v319, %v320
          %v322 = vadd.f32 %v313, %v321
          %vm323 = vcmask 253952
          %324 = vst.msk [vmem:[#allocation2] sm:$0x1] %vm323, %v322
          %v325 = vld [vmem:[#allocation2 + $0x1] sm:$0x1]
          %v326 = vmul.f32 %v302, %v302
          %v327 = vsel %vm314, %v326, 0.0
          %v328 = vrot.slane %v327, 4
          %v329 = vadd.f32 %v327, %v328
          %v330 = vrot.slane %v329, 2
          %v331 = vadd.f32 %v329, %v330
          %v332 = vrot.slane %v331, 1
          %v333 = vadd.f32 %v331, %v332
          %v334 = vadd.f32 %v325, %v333
          %335 = vst.msk [vmem:[#allocation2 + $0x1] sm:$0x1] %vm323, %v334
          // Predicated region
          $region53: #{tpu_custom_call.1} parent=47 // pred_check
            %p336 = pneg %p307
          $region54: #{tpu_custom_call.1} parent=47 // pred_check_branch
            %338 = sbr.rel (%p336) target = $region56
          $region55: #{tpu_custom_call.1} parent=47 // pred_region
            %v339 = vld [vmem:[#allocation2] sm:$0x1]
            %v340 = vmul.f32 %v339, 0.125
            %v341 = vld [vmem:[#allocation2 + $0x1] sm:$0x1]
            %v342 = vmul.f32 %v341, 0.125
            %v343 = vmul.f32 %v340, %v340
            %v344 = vsub.f32 %v342, %v343
            %v345 = vadd.f32 %v344, 1e-05
            %v346 = vrsqrt.pop %v345
            %v347 = vmul.f32 %v218, %v346
            %348 = vst.msk [vmem:[#allocation3] sm:$0x1] %vm323, %v347
            %v349 = vmul.f32 %v340, %v347
            %v350 = vsub.f32 %v219, %v349
            %351 = vst.msk [vmem:[#allocation3 + $0x1] sm:$0x1] %vm323, %v350
          $region56: #{tpu_custom_call.1} parent=47 // pred_fallthru
            _
          %vm352 = vcmask 57344
          %353 = vst.msk [vmem:[#allocation10] sm:$0x1] %vm352, 0.0
        $region48: #{tpu_custom_call.1} parent=35 // pred_fallthru
          _
        %p354 = scmp.eq.s32.totalorder %s23, 1
        // Predicated region
        $region57: #{tpu_custom_call.1} parent=35 // pred_check
          %p355 = pneg %p354
        $region58: #{tpu_custom_call.1} parent=35 // pred_check_branch
          %357 = sbr.rel (%p355) target = $region60
        $region59: #{tpu_custom_call.1} parent=35 // pred_region
          %v358 = vld [vmem:[#allocation3] sm:$0x1]
          %v359 = vlaneseq
          %v360 = vshrl.u32 %v359, 7
          %v361 = vsub.s32 0, %v360
          %v362 = vrot.slane %v358, %v361
          %v363 = vmul.f32 %v302, %v362
          %v364 = vld [vmem:[#allocation3 + $0x1] sm:$0x1]
          %v365 = vlaneseq
          %v366 = vshrl.u32 %v365, 7
          %v367 = vsub.s32 0, %v366
          %v368 = vrot.slane %v364, %v367
          %v369 = vadd.f32 %v363, %v368
          %v370 = vlaneseq
          %v371 = vshrl.u32 %v370, 7
          %v372 = vsub.s32 0, %v371
          %v373 = vrot.slane %v220, %v372
          %v374 = vmul.f32 %v369, %v373
          %vm375 = vcmask 261120
          %v376 = vsel %vm375, %v374, 0.0
          %377 = vadd.xlane.f32.xlu0 %v376
          %v378 = vpop.xlane.xlu0 %377
          %s379 = sld [smem:[#allocation4]]
          %v380 = vstv %s379
          %v381 = vadd.f32 %v378, %v380
          %v383 = vlaneseq
          %v384 = vand.u32 %v383, 127
          %v385 = vlaneseq
          %v386 = vshrl.u32 %v385, 7
          %v387 = vsub.s32 %v384, %v386
          %v388 = vrot.slane %v381, %v387
          %vm390 = vcmask 57344
          %391 = vst.msk [vmem:[#allocation10] sm:$0x1] %vm390, %v388
        $region60: #{tpu_custom_call.1} parent=35 // pred_fallthru
          _
        // Predicated region
        $region61: #{tpu_custom_call.1} parent=35 // pred_check
          %p392 = pneg %p138
        $region62: #{tpu_custom_call.1} parent=35 // pred_check_branch
          %394 = sbr.rel (%p392) target = $region64
        $region63: #{tpu_custom_call.1} parent=35 // pred_region
          %s396 = ssub.s32 16, 16
          %397 = vsyncadd [#allocation7], %s396
          %s398 = smul.addr %s24, 16
          %s399 = scalar_lea.hbm %s4, %s398
          %s401 = sshll.u32 [#allocation10], 4
          %s402 = int_to_ptr.vmem [resolvable:$true] %s401
          %404 = dma.vmem_to_hbm [thread:$0]  %s402, 16, %s399, [#allocation7]
        $region64: #{tpu_custom_call.1} parent=35 // pred_fallthru
          _
        // Predicated region
        $region65: #{tpu_custom_call.1} parent=35 // pred_check
          %p405 = pneg %p138
        $region66: #{tpu_custom_call.1} parent=35 // pred_check_branch
          %407 = sbr.rel (%p405) target = $region68
        $region67: #{tpu_custom_call.1} parent=35 // pred_region
          %408 = dma.done [#allocation7], 16
        $region68: #{tpu_custom_call.1} parent=35 // pred_fallthru
          _
      $region36: #{tpu_custom_call.1} parent=5 // pred_fallthru
        _
      %p409 = scmp.le.s32.totalorder 2, %s14
      // Predicated region
      $region69: #{tpu_custom_call.1} parent=5 // pred_check
        %p410 = pneg %p409
      $region70: #{tpu_custom_call.1} parent=5 // pred_check_branch
        %412 = sbr.rel (%p410) target = $region72
      $region71: #{tpu_custom_call.1} parent=5 // pred_region
        %s413 = ssub.s32 %s14, 2
      $region72: #{tpu_custom_call.1} parent=5 // pred_fallthru
        _
    $region6: #{tpu_custom_call.1} parent=1 // loop_footer
      %s18 = sadd.s32 1, %s14
    $region7: #{tpu_custom_call.1} parent=1 // loop_footer_branch
      %13 = sbr.rel target = $region3
    $region8: #{tpu_custom_call.1} parent=1 // loop_exit
      _
    %414 = vsyncpa [#allocation6], 1
    %s415 = scalar_lea.sflag [#allocation6], 1
    %416 = vsyncpa %s415, 1
    %417 = vsyncpa [#allocation9], 1
    %418 = vsyncpa [#allocation7], 1
    %s419 = scalar_lea.sflag [#allocation7], 1
    %420 = vsyncpa %s419, 1

</llo_original>
